<compile_context>
chip_gen: v7x
topology: tpu7x:2x2x1
jax: 0.10.0
libtpu: 0.0.40
codegen_flags: <defaults>
</compile_context>

<pallas_src>
import functools

import numpy as np

import jax
import jax.numpy as jnp
from jax import lax
from jax.experimental import pallas as pl
from jax.experimental.pallas import tpu as pltpu


# --------------------------------------------------------------------------- #
# Kernel
# --------------------------------------------------------------------------- #
def _posenc_kernel(scale_ref, bias_ref, o_ref, *, pos_per_row):
    """One row tile of the PE table in a lane-dense layout.

    scale_ref, bias_ref: (1, width) precomputed constant rows:
        scale[c] = factor(c % d_model) mod 2*pi
        bias[c]  = (c // d_model) * scale[c] + phase(c)      (phase = 0 / pi/2)
    The position encoded at element (r, c) is  pos = r * pos_per_row + c // d_model,
    so  angle = (r * pos_per_row) * scale + bias  and the table value is sin(angle)
    (cos on odd columns via the pi/2 phase).
    """
    rows, _ = o_ref.shape
    row0 = pl.program_id(0) * rows
    r = lax.broadcasted_iota(jnp.int32, (rows, 1), 0) + row0       # (rows, 1) int32
    pos = (r * pos_per_row).astype(jnp.float32)                    # exact for pos < 2**24
    angle = pos * scale_ref[...] + bias_ref[...]                    # (rows, width) via broadcast
    o_ref[...] = jnp.sin(angle).astype(o_ref.dtype)


# --------------------------------------------------------------------------- #
# Table builder (one-time cost, mirrors the torch __init__)
# --------------------------------------------------------------------------- #
def _pick_row_tile(n_rows, width, itemsize, sublane, target_bytes=1 << 20, min_steps=4):
    """Row tile giving >= ~min_steps grid steps (v7x megacore + store/compute overlap)
    with blocks <= ~target_bytes, rounded to the sublane multiple for the dtype."""
    if n_rows <= sublane:
        return n_rows                                   # full dim (allowed block shape)
    by_bytes = max(sublane, target_bytes // (itemsize * width))
    by_steps = max(sublane, -(-n_rows // min_steps))    # cdiv
    rows = min(n_rows, by_bytes, by_steps)
    return max(sublane, (rows // sublane) * sublane)


def build_pos_enc_table(d_model, max_len=512, out_dtype=jnp.float32, row_tile=None):
    """Builds the (max_len, d_model) sinusoidal table with a Pallas kernel."""
    assert d_model % 2 == 0, "d_model must be even (as the PyTorch module requires)"
    itemsize = np.dtype(out_dtype).itemsize
    sublane = max(8, 32 // itemsize)                    # 8 for f32, 16 for bf16

    # Host-side column constants in float64, range-reduced mod 2*pi (exact for integer
    # positions).  Positive exponent is faithful to the given module.
    k = np.arange(0, d_model, 2, dtype=np.float64)
    factor = np.power(10000.0, k / d_model)
    factor_red = np.mod(factor, 2.0 * np.pi)
    scale_d = np.repeat(factor_red, 2)                                  # f0,f0,f1,f1,...
    phase_d = np.tile(np.array([0.0, np.pi / 2.0]), d_model // 2)       # 0,pi/2,0,pi/2,...

    if d_model % 128 == 0:
        # Already lane-dense: one position per output row.
        width, ppr, padded_len = d_model, 1, max_len
        scale_w, bias_w = scale_d, phase_d
    elif 128 % d_model == 0:
        # Pack 128 // d_model consecutive positions into each 128-lane row.
        ppr = 128 // d_model
        width = 128
        padded_len = ppr * pl.cdiv(max_len, ppr)
        lane_pos = np.repeat(np.arange(ppr, dtype=np.float64), d_model)  # c // d_model
        scale_w = np.tile(scale_d, ppr)
        bias_w = lane_pos * scale_w + np.tile(phase_d, ppr)
    else:
        # TODO(synk): for d_model with neither d%128==0 nor 128%d==0 the stores are
        # lane-masked (correct, just not store-optimal).
        width, ppr, padded_len = d_model, 1, max_len
        scale_w, bias_w = scale_d, phase_d

    n_rows = padded_len // ppr
    scale_row = jnp.asarray(scale_w, jnp.float32).reshape(1, width)
    bias_row = jnp.asarray(bias_w, jnp.float32).reshape(1, width)

    if row_tile is None:
        row_tile = _pick_row_tile(n_rows, width, itemsize, sublane)
    grid = (pl.cdiv(n_rows, row_tile),)

    flat = pl.pallas_call(
        functools.partial(_posenc_kernel, pos_per_row=ppr),
        out_shape=jax.ShapeDtypeStruct((n_rows, width), out_dtype),
        grid=grid,
        in_specs=[pl.BlockSpec((1, width), lambda i: (0, 0)),
                  pl.BlockSpec((1, width), lambda i: (0, 0))],
        out_specs=pl.BlockSpec((row_tile, width), lambda i: (i, 0)),
        compiler_params=pltpu.CompilerParams(dimension_semantics=("parallel",)),
    )(scale_row, bias_row)

    if ppr > 1:
        flat = flat.reshape(padded_len, d_model)[:max_len]
    return flat


# --------------------------------------------------------------------------- #
# Module wrapper (table cached across calls, like the torch nn.Parameter buffer)
# --------------------------------------------------------------------------- #
class PosEnc:
    def __init__(self, d_model, max_len=512, out_dtype=jnp.float32, row_tile=None):
        self.d_model = d_model
        self.max_len = max_len
        # One-time Pallas build; forward() never relaunches the kernel.
        self.weight = build_pos_enc_table(d_model, max_len, out_dtype=out_dtype,
                                          row_tile=row_tile)            # (max_len, d_model)

    def __call__(self, x):
        # TODO(synk): torch forward prints a generator object (pure side effect,
        # no numerical impact) — not reproduced.
        B, L = x.shape[0], x.shape[1]
        assert L <= self.max_len, "sequence length exceeds max_len"
        # NOTE: broadcast_to is a free view when the result is consumed inside the same
        # jit; materializing B contiguous copies (torch.cat semantics) only happens if
        # the caller forces it.
        return jnp.broadcast_to(self.weight[None, :L, :], (B, L, self.d_model))


# --------------------------------------------------------------------------- #
# References
# --------------------------------------------------------------------------- #
def _reference_ground_truth(d_model, max_len):
    """float64 ground truth of the module's math (numpy, host-side)."""
    pos = np.arange(max_len, dtype=np.float64)[:, None]
    factor = np.power(10000.0, np.arange(0, d_model, 2, dtype=np.float64) / d_model)
    pe = np.zeros((max_len, d_model), np.float64)
    pe[:, 0::2] = np.sin(pos * factor)
    pe[:, 1::2] = np.cos(pos * factor)
    return pe.astype(np.float32)


def _reference_f32(d_model, max_len):
    """Pure-JAX f32 reference mirroring the PyTorch __init__ literally (large angles)."""
    pos = jnp.arange(max_len, dtype=jnp.float32)[:, None]
    factor = 10000.0 ** (jnp.arange(0, d_model, 2, dtype=jnp.float32) / d_model)
    pe = jnp.zeros((max_len, d_model), jnp.float32)
    pe = pe.at[:, 0::2].set(jnp.sin(pos * factor))
    pe = pe.at[:, 1::2].set(jnp.cos(pos * factor))
    return pe


# --------------------------------------------------------------------------- #
# Demo / checks
# --------------------------------------------------------------------------- #
if __name__ == "__main__":
    key = jax.random.PRNGKey(0)

    # --- demo 1: lane-dense d_model (multiple of 128), cached-table forward path ---
    B, L, D_IN, d_model, max_len = 2, 8, 16, 128, 64
    x = jax.random.normal(key, (B, L, D_IN), dtype=jnp.float32)
    penc = PosEnc(d_model, max_len=max_len)            # Pallas kernel runs once here
    out = jax.block_until_ready(penc(x))
    assert out.shape == (B, L, d_model)

    gt = _reference_ground_truth(d_model, max_len)
    # Whole cached table vs float64 ground truth: mod-2pi reduced angles keep f32 tight.
    assert np.allclose(np.asarray(jax.block_until_ready(penc.weight)), gt,
                       atol=1e-3, rtol=0.0)
    # Batch copies identical; forward equals the first L rows of the table.
    assert jnp.array_equal(out[0], out[1])
    assert np.allclose(np.asarray(out[0]), gt[:L], atol=1e-3, rtol=0.0)
    # Against the literal-f32 (large-angle) reference: low-frequency columns are tight;
    # high-frequency columns of that reference carry ~1e-2 of their own rounding error.
    ref32 = _reference_f32(d_model, max_len)
    assert jnp.allclose(out[0][:, :2], ref32[:L, :2], atol=1e-4, rtol=0.0)
    assert jnp.allclose(out[0], ref32[:L], atol=5e-2, rtol=0.0)

    # --- demo 2: small d_model packed 128-lane-dense (4 positions per output row) ---
    B2, L2, D_IN2, d_model2, max_len2 = 3, 24, 4, 32, 128
    x2 = jax.random.normal(jax.random.PRNGKey(0), (B2, L2, D_IN2), dtype=jnp.float32)
    penc2 = PosEnc(d_model2, max_len=max_len2)
    out2 = jax.block_until_ready(penc2(x2))
    gt2 = _reference_ground_truth(d_model2, max_len2)
    assert out2.shape == (B2, L2, d_model2)
    assert np.allclose(np.asarray(jax.block_until_ready(penc2.weight)), gt2,
                       atol=1e-3, rtol=0.0)
    assert np.allclose(np.asarray(out2[0]), gt2[:L2], atol=1e-3, rtol=0.0)
    assert jnp.array_equal(out2[0], out2[2])

    # Tiling must be numerically pure: different row tiles -> bit-identical table.
    t_a = jax.block_until_ready(build_pos_enc_table(d_model2, max_len2, row_tile=8))
    t_b = jax.block_until_ready(build_pos_enc_table(d_model2, max_len2, row_tile=32))
    assert jnp.array_equal(t_a, t_b)

    print("KERNEL_OK")
</pallas_src>

<mosaic_0001>
module attributes {stable_mosaic.version = 11 : i64} {
  func.func @_posenc_kernel(%arg0: i32, %arg1: memref<1x128xf32, #tpu.memory_space<vmem>>, %arg2: memref<1x128xf32, #tpu.memory_space<vmem>>, %arg3: memref<16x128xf32, #tpu.memory_space<vmem>>) attributes {dimension_semantics = [#tpu.dimension_semantics<parallel>], iteration_bounds = array<i64: 4>, scalar_prefetch = 0 : i64, scratch_operands = 0 : i64, tpu.core_type = #tpu.core_type<tc>, window_params = [{pipeline_mode = #tpu.pipeline_mode<synchronous>, transform_indices = @transform_0, window_bounds = array<i64: 1, 128>}, {pipeline_mode = #tpu.pipeline_mode<synchronous>, transform_indices = @transform_1, window_bounds = array<i64: 1, 128>}, {transform_indices = @transform_2, window_bounds = array<i64: 16, 128>}]} {
    %c16_i32 = arith.constant 16 : i32
    %0 = arith.muli %arg0, %c16_i32 : i32
    %1 = tpu.iota {dimensions = array<i32: 0>} : vector<16x1xi32>
    %2 = vector.broadcast %0 : i32 to vector<16x1xi32>
    %3 = arith.addi %1, %2 : vector<16x1xi32>
    %c1_i32 = arith.constant 1 : i32
    %4 = vector.broadcast %c1_i32 : i32 to vector<16x1xi32>
    %5 = arith.muli %3, %4 : vector<16x1xi32>
    %6 = arith.sitofp %5 : vector<16x1xi32> to vector<16x1xf32>
    %c0 = arith.constant 0 : index
    %c0_0 = arith.constant 0 : index
    %7 = vector.load %arg1[%c0, %c0_0] : memref<1x128xf32, #tpu.memory_space<vmem>>, vector<1x128xf32>
    %8 = vector.broadcast %6 : vector<16x1xf32> to vector<16x128xf32>
    %9 = vector.broadcast %7 : vector<1x128xf32> to vector<16x128xf32>
    %10 = arith.mulf %8, %9 : vector<16x128xf32>
    %c0_1 = arith.constant 0 : index
    %c0_2 = arith.constant 0 : index
    %11 = vector.load %arg2[%c0_1, %c0_2] : memref<1x128xf32, #tpu.memory_space<vmem>>, vector<1x128xf32>
    %12 = vector.broadcast %11 : vector<1x128xf32> to vector<16x128xf32>
    %13 = arith.addf %10, %12 : vector<16x128xf32>
    %14 = math.sin %13 : vector<16x128xf32>
    %c0_3 = arith.constant 0 : index
    %c0_4 = arith.constant 0 : index
    %15 = vector.load %arg3[%c0_3, %c0_4] : memref<16x128xf32, #tpu.memory_space<vmem>>, vector<16x128xf32>
    tpu.vector_store %arg3[%c0_3, %c0_4], %14 {strides = array<i32>} : memref<16x128xf32, #tpu.memory_space<vmem>>, vector<16x128xf32>,
    return
  }
  func.func @transform_0(%arg0: i32) -> (i32, i32) {
    %c0_i32 = arith.constant 0 : i32
    %c0_i32_0 = arith.constant 0 : i32
    %c0_i32_1 = arith.constant 0 : i32
    return %c0_i32, %c0_i32_0 : i32, i32
  }
  func.func @transform_1(%arg0: i32) -> (i32, i32) {
    %c0_i32 = arith.constant 0 : i32
    %c0_i32_0 = arith.constant 0 : i32
    %c0_i32_1 = arith.constant 0 : i32
    return %c0_i32, %c0_i32_0 : i32, i32
  }
  func.func @transform_2(%arg0: i32) -> (i32, i32) {
    %c0_i32 = arith.constant 0 : i32
    %c0_i32_0 = arith.constant 0 : i32
    return %arg0, %c0_i32 : i32, i32
  }
}

</mosaic_0001>

<llo_original>
// kernel: tpu_custom_call.1
$region0: #{tpu_custom_call.1}
  #allocation0 [shape = 'u32[]', space=smem, size = 0x4, offset = 0x4, fixed_abs, tag = 'smem constant byte address 0x4 - core index']
  #allocation1 [shape = 'u32[144,128]{1,0:T(1,128)}', space=vmem, size = 0x12000, scoped, tag = 'internal scratch']
  %s0 = inlined_call_operand.hbm [shape: f32[1,128], index: 0, kind: input, shape index: {}]
  %s1 = inlined_call_operand.vmem [shape: f32[1,128], index: 1, kind: input, shape index: {}]
  %s2 = inlined_call_operand.hbm [shape: f32[64,128], index: 2, kind: output, shape index: {}]
  %s3 = sld [smem:[#allocation0]]
  $region45: #{tpu_custom_call.1} parent=0
    _
  %s5 = ssub.s32 1, %s3
  %s6 = scalar_select 0, %s5, %s3
  $region1: #{tpu_custom_call.1} parent=0
    #allocation2 [shape = 'u8[512]{0}', space=vmem, size = 0x400, scoped, tag = 'input window, operand 0, single buffered']
    #allocation3 [shape = 's32[2]{0}', space=sflag, size = 0x8, scoped, tag = 'scoped memory for tpu_custom_call.1']
    #allocation4 [shape = 's32[2]{0}', space=sflag, size = 0x8, scoped, tag = 'scoped memory for tpu_custom_call.1']
    #allocation5 [shape = 'u8[16384]{0}', space=vmem, size = 0x4000, scoped, tag = 'output window, operand 0']
    %7 = vsyncpa [#allocation3], 0
    %8 = vsyncpa [#allocation4], 0
    %s9 = scalar_lea.sflag [#allocation4], 1
    %10 = vsyncpa %s9, 0
    loop: start=0, step=1, limit=6
    $region2: #{tpu_custom_call.1} parent=1 // loop_pre_header
      _
    $region3: #{tpu_custom_call.1} parent=1 // loop_header
      %s12 = sphi 0, %s16
      %p13 = scmp.ge.s32.totalorder %s12, 6
      %s20 = sphi 0, %s20
      %s22 = sphi 0, %s20
      %s23 = sphi 0, %s22
      %s37 = sphi 0, %s23
      %s41 = sphi 0, %s41
      %s43 = sphi 0, %s41
      %s44 = sphi 0, %s43
      %s58 = sphi 0, %s44
      %s64 = sphi 0, %s66
      %s67 = sphi 0, %s64
      %s68 = sphi 0, %s67
      %s84 = sphi 0, %s68
    $region4: #{tpu_custom_call.1} parent=1 // loop_header_branch
      %15 = sbr.rel (%p13) target = $region8
    $region5: #{tpu_custom_call.1} parent=1 // loop_body
      %s17 = ssub.s32 %s12, 1
      %s18 = ssub.s32 %s12, 2
      %s19 = sadd.s32 %s12, 1
      %s21 = sadd.s32 %s20, 1
      %p24 = scmp.eq.s32.totalorder %s12, 3
      %p25 = scmp.ne.s32.totalorder %s20, %s22
      %p26 = scmp.eq.s32.totalorder %s12, 0
      %p27 = por %p25, %p26
      %p28 = scmp.ne.s32.totalorder %s20, %s22
      %p29 = scmp.eq.s32.totalorder %s17, 3
      %p30 = por %p28, %p29
      %p31 = scmp.ne.s32.totalorder %s22, %s23
      %p32 = scmp.eq.s32.totalorder %s17, 0
      %p33 = por %p31, %p32
      %p34 = scmp.ne.s32.totalorder %s22, %s23
      %p35 = scmp.eq.s32.totalorder %s18, 3
      %p36 = por %p34, %p35
      %p38 = scmp.ne.s32.totalorder %s23, %s37
      %p39 = scmp.eq.s32.totalorder %s18, 0
      %p40 = por %p38, %p39
      %s42 = sadd.s32 %s41, 1
      %p45 = scmp.eq.s32.totalorder %s12, 3
      %p46 = scmp.ne.s32.totalorder %s41, %s43
      %p47 = scmp.eq.s32.totalorder %s12, 0
      %p48 = por %p46, %p47
      %p49 = scmp.ne.s32.totalorder %s41, %s43
      %p50 = scmp.eq.s32.totalorder %s17, 3
      %p51 = por %p49, %p50
      %p52 = scmp.ne.s32.totalorder %s43, %s44
      %p53 = scmp.eq.s32.totalorder %s17, 0
      %p54 = por %p52, %p53
      %p55 = scmp.ne.s32.totalorder %s43, %s44
      %p56 = scmp.eq.s32.totalorder %s18, 3
      %p57 = por %p55, %p56
      %p59 = scmp.ne.s32.totalorder %s44, %s58
      %p60 = scmp.eq.s32.totalorder %s18, 0
      %p61 = por %p59, %p60
      %s62 = ssub.s32 %s12, %s19
      %p63 = scmp.eq.s32.totalorder %s62, 0
      %s65 = sadd.s32 %s64, 1
      %s66 = scalar_select %p63, %s64, %s65
      %p69 = pneg %p63
      %p70 = scmp.eq.s32.totalorder %s12, 3
      %p71 = por %p69, %p70
      %p72 = scmp.ne.s32.totalorder %s64, %s67
      %p73 = scmp.eq.s32.totalorder %s12, 0
      %p74 = por %p72, %p73
      %p75 = scmp.ne.s32.totalorder %s64, %s67
      %p76 = scmp.eq.s32.totalorder %s17, 3
      %p77 = por %p75, %p76
      %p78 = scmp.ne.s32.totalorder %s67, %s68
      %p79 = scmp.eq.s32.totalorder %s17, 0
      %p80 = por %p78, %p79
      %p81 = scmp.ne.s32.totalorder %s67, %s68
      %p82 = scmp.eq.s32.totalorder %s18, 3
      %p83 = por %p81, %p82
      %p85 = scmp.ne.s32.totalorder %s68, %s84
      %p86 = scmp.eq.s32.totalorder %s18, 0
      %p87 = por %p85, %p86
      %p88 = scmp.le.s32.totalorder 1, %s12
      %p89 = scmp.lt.s32.totalorder %s12, 5
      %p90 = pnand %p88, %p89
      %p91 = pneg %p90
      // Predicated region
      $region9: #{tpu_custom_call.1} parent=5 // pred_check
        _
      $region10: #{tpu_custom_call.1} parent=5 // pred_check_branch
        %93 = sbr.rel (%p90) target = $region12
      $region11: #{tpu_custom_call.1} parent=5 // pred_region
        %s94 = ssub.s32 %s12, 1
        // Predicated region
        $region13: #{tpu_custom_call.1} parent=11 // pred_check
          %p95 = pneg %p33
        $region14: #{tpu_custom_call.1} parent=11 // pred_check_branch
          %97 = sbr.rel (%p95) target = $region16
        $region15: #{tpu_custom_call.1} parent=11 // pred_region
          %s99 = ssub.s32 16, 16
          %100 = vsyncadd [#allocation3], %s99
          %s102 = sshll.u32 [#allocation2], 4
          %s103 = int_to_ptr.vmem [resolvable:$true] %s102
          %105 = dma.hbm_to_vmem [thread:$0]  %s0, 16, %s103, [#allocation3]
        $region16: #{tpu_custom_call.1} parent=11 // pred_fallthru
          _
        // Predicated region
        $region17: #{tpu_custom_call.1} parent=11 // pred_check
          %p106 = pneg %p54
        $region18: #{tpu_custom_call.1} parent=11 // pred_check_branch
          %108 = sbr.rel (%p106) target = $region20
        $region19: #{tpu_custom_call.1} parent=11 // pred_region
          _
        $region20: #{tpu_custom_call.1} parent=11 // pred_fallthru
          _
      $region12: #{tpu_custom_call.1} parent=5 // pred_fallthru
        _
      %p109 = scmp.lt.s32.totalorder %s12, 4
      // Predicated region
      $region21: #{tpu_custom_call.1} parent=5 // pred_check
        %p110 = pneg %p109
      $region22: #{tpu_custom_call.1} parent=5 // pred_check_branch
        %112 = sbr.rel (%p110) target = $region24
      $region23: #{tpu_custom_call.1} parent=5 // pred_region
        _
      $region24: #{tpu_custom_call.1} parent=5 // pred_fallthru
        _
      %p113 = scmp.le.s32.totalorder 1, %s12
      %p114 = scmp.lt.s32.totalorder %s12, 5
      %p115 = pnand %p113, %p114
      %p116 = pneg %p115
      // Predicated region
      $region25: #{tpu_custom_call.1} parent=5 // pred_check
        _
      $region26: #{tpu_custom_call.1} parent=5 // pred_check_branch
        %118 = sbr.rel (%p115) target = $region28
      $region27: #{tpu_custom_call.1} parent=5 // pred_region
        %s119 = ssub.s32 %s12, 1
        // Predicated region
        $region29: #{tpu_custom_call.1} parent=27 // pred_check
          %p120 = pneg %p33
        $region30: #{tpu_custom_call.1} parent=27 // pred_check_branch
          %122 = sbr.rel (%p120) target = $region32
        $region31: #{tpu_custom_call.1} parent=27 // pred_region
          %123 = dma.done [#allocation3], 16
        $region32: #{tpu_custom_call.1} parent=27 // pred_fallthru
          _
        %p124 = pneg %p33
        %p125 = pneg %p30
        %p126 = pneg %p54
        %p127 = pneg %p51
        %p128 = pneg %p80
        %p129 = pneg %p77
        %s130 = sand.u32 %s67, 1
        %s131 = scalar_lea.sflag [#allocation4], %s130
        %s132 = sand.u32 %s67, 1
        %s133 = smul.addr %s132, 16
        %s134 = scalar_lea.vmem [#allocation5], %s133
        %s135 = smul.u32 2, %s17
        %s136 = smul.u32 %s17, 16
        %v137 = vlaneseq
        %v138 = vshrl.u32 %v137, 7
        %v139 = vadd.s32 %v138, 8
        %v140 = vstv %s136
        %v141 = vadd.s32 %v138, %v140
        %v142 = vadd.s32 %v139, %v140
        %v143 = vcvt.s32.f32 %v141
        %v144 = vcvt.s32.f32 %v142
        %v145 = vld [vmem:[#allocation2] sm:$0x1]
        %v147 = vlaneseq
        %v148 = vshrl.u32 %v147, 7
        %v149 = vsub.s32 0, %v148
        %v150 = vrot.slane %v145, %v149
        %v152 = vmul.f32 %v143, %v150
        %v153 = vmul.f32 %v144, %v150
        %v154 = vld [vmem:[%s1] sm:$0x1]
        %v156 = vlaneseq
        %v157 = vshrl.u32 %v156, 7
        %v158 = vsub.s32 0, %v157
        %v159 = vrot.slane %v154, %v158
        %v161 = vadd.f32 %v152, %v159
        %v162 = vadd.f32 %v153, %v159
        %v163 = vand.u32 2147483647, %v161
        %vm164 = vcmp.le.f32.partialorder %v163, 0.7853982
        %vm165 = vcmp.lt.s32.totalorder %v161, 0
        %v166 = vand.u32 %v161, 2139095040
        %v167 = vshrl.u32 %v166, 23
        %v168 = vsub.s32 %v167, 127
        %v169 = vand.u32 2147483647, %v161
        %v170 = vand.u32 %v169, 8388607
        %v171 = vor.u32 %v170, 8388608
        %v172 = vsub.s32 0, %v171
        %v173 = vadd.s32 %v168, 1
        %vm174 = vcmp.gt.s32.totalorder %v173, 0
        %v175 = vsel %vm174, %v173, 0
        %v176 = vshrl.u32 %v175, 5
        %v177 = vand.u32 %v175, 31
        %v178 = vsub.s32 32, %v177
        %v179 = vshrl.u32 683565275, %v178
        %v180 = vshll.u32 683565275, %v177
        %v181 = vshrl.u32 2475754826, %v178
        %v182 = vor.u32 %v180, %v181
        %v183 = vshll.u32 2475754826, %v177
        %v184 = vshrl.u32 2131351028, %v178
        %v185 = vor.u32 %v183, %v184
        %v186 = vshll.u32 2131351028, %v177
        %v187 = vshrl.u32 2102212464, %v178
        %v188 = vor.u32 %v186, %v187
        %v189 = vshll.u32 2102212464, %v177
        %v190 = vshrl.u32 920167782, %v178
        %v191 = vor.u32 %v189, %v190
        %v192 = vshll.u32 920167782, %v177
        %v193 = vshrl.u32 1326507024, %v178
        %v194 = vor.u32 %v192, %v193
        %vm195 = vcmp.lt.s32.totalorder %v176, 1
        %vm196 = vcmp.lt.s32.totalorder %v176, 2
        %vm197 = vcmp.lt.s32.totalorder %v176, 3
        %vm198 = vcmp.lt.s32.totalorder %v176, 4
        %v199 = vsel %vm195, %v179, %v182
        %v200 = vsel %vm198, %v188, 2102212464
        %v201 = vsel %vm197, %v185, %v200
        %v202 = vsel %vm196, %v199, %v201
        %v203 = vsel %vm195, %v182, %v185
        %v204 = vsel %vm198, %v191, 920167782
        %v205 = vsel %vm197, %v188, %v204
        %v206 = vsel %vm196, %v203, %v205
        %v207 = vsel %vm195, %v185, %v188
        %v208 = vsel %vm198, %v194, 1326507024
        %v209 = vsel %vm197, %v191, %v208
        %v210 = vsel %vm196, %v207, %v209
        %v211 = vshll.u32 %v171, 8
        %v212 = vmul.u32.u64.compose %v211, %v210
        %v213 = vextract.low.u32 %v212
        %v214 = vextract.high.u32 %v212
        %v215 = vmul.u32.u64.compose %v211, %v206
        %v216 = vextract.low.u32 %v215
        %v217 = vextract.high.u32 %v215
        %v218 = vmul.u32 %v211, %v202
        %v219 = vadd.s32 %v214, %v216
        %vm220 = vc.u32 %v214, %v216
        %v221 = vadd.s32 %v217, 1
        %v222 = vsel %vm220, %v221, %v217
        %v223 = vadd.s32 %v218, %v222
        %v224 = vadd.s32 %v223, 536870912
        %v225 = vshrl.u32 %v224, 30
        %v226 = vshll.u32 %v225, 30
        %v227 = vsub.s32 %v223, %v226
        %vm228 = vcmp.lt.s32.totalorder %v227, 0
        %v229 = vsub.s32 0, %v227
        %v230 = vsel %vm228, %v229, %v227
        %v231 = vclz %v230
        %v232 = vsub.s32 %v231, 2
        %vm233 = vcmp.gt.s32.totalorder 0, %v232
        %v234 = vsel %vm233, 0, %v232
        %v235 = vsub.s32 32, %v234
        %v236 = vshll.u32 %v227, %v234
        %v237 = vshrl.u32 %v219, %v235
        %v238 = vor.u32 %v236, %v237
        %v239 = vsub.s32 4294967266, %v234
        %v240 = vadd.s32 %v239, 127
        %v241 = vshll.u32 %v240, 23
        %v242 = vor.u32 4788187, %v241
        %v243 = vand.u32 2147483647, %v242
        %v245 = vcvt.s32.f32 %v238
        %v246 = vmul.f32 %v245, %v243
        %v247 = vxor.u32 %v246, 2147483648
        %v248 = vsel %vm165, %v247, %v246
        %v249 = vsub.s32 4, %v225
        %v250 = vsel %vm165, %v249, %v225
        %v251 = vsel %vm164, %v161, %v248
        %v252 = vsel %vm164, 0, %v250
        %v253 = vcosq.f32.pop %v251
        %v254 = vsinq.f32.pop %v251
        %vm255 = vweird.f32 %v161
        %v256 = vadd.s32 %v252, 3
        %v257 = vand.u32 %v256, 3
        %vm258 = vcmp.lt.s32.totalorder %v257, 2
        %vm259 = vcmp.eq.s32.totalorder %v257, 0
        %v260 = vxor.u32 %v254, 2147483648
        %v261 = vsel %vm259, %v253, %v260
        %vm262 = vcmp.eq.s32.totalorder %v257, 2
        %v263 = vxor.u32 %v253, 2147483648
        %v264 = vsel %vm262, %v263, %v254
        %v265 = vsel %vm258, %v261, %v264
        %v266 = vsel %vm255, nan, %v265
        %v267 = vand.u32 2147483647, %v162
        %vm268 = vcmp.le.f32.partialorder %v267, 0.7853982
        %vm269 = vcmp.lt.s32.totalorder %v162, 0
        %v270 = vand.u32 %v162, 2139095040
        %v271 = vshrl.u32 %v270, 23
        %v272 = vsub.s32 %v271, 127
        %v273 = vand.u32 2147483647, %v162
        %v274 = vand.u32 %v273, 8388607
        %v275 = vor.u32 %v274, 8388608
        %v276 = vsub.s32 0, %v275
        %v277 = vadd.s32 %v272, 1
        %vm278 = vcmp.gt.s32.totalorder %v277, 0
        %v279 = vsel %vm278, %v277, 0
        %v280 = vshrl.u32 %v279, 5
        %v281 = vand.u32 %v279, 31
        %v282 = vsub.s32 32, %v281
        %v283 = vshrl.u32 683565275, %v282
        %v284 = vshll.u32 683565275, %v281
        %v285 = vshrl.u32 2475754826, %v282
        %v286 = vor.u32 %v284, %v285
        %v287 = vshll.u32 2475754826, %v281
        %v288 = vshrl.u32 2131351028, %v282
        %v289 = vor.u32 %v287, %v288
        %v290 = vshll.u32 2131351028, %v281
        %v291 = vshrl.u32 2102212464, %v282
        %v292 = vor.u32 %v290, %v291
        %v293 = vshll.u32 2102212464, %v281
        %v294 = vshrl.u32 920167782, %v282
        %v295 = vor.u32 %v293, %v294
        %v296 = vshll.u32 920167782, %v281
        %v297 = vshrl.u32 1326507024, %v282
        %v298 = vor.u32 %v296, %v297
        %vm299 = vcmp.lt.s32.totalorder %v280, 1
        %vm300 = vcmp.lt.s32.totalorder %v280, 2
        %vm301 = vcmp.lt.s32.totalorder %v280, 3
        %vm302 = vcmp.lt.s32.totalorder %v280, 4
        %v303 = vsel %vm299, %v283, %v286
        %v304 = vsel %vm302, %v292, 2102212464
        %v305 = vsel %vm301, %v289, %v304
        %v306 = vsel %vm300, %v303, %v305
        %v307 = vsel %vm299, %v286, %v289
        %v308 = vsel %vm302, %v295, 920167782
        %v309 = vsel %vm301, %v292, %v308
        %v310 = vsel %vm300, %v307, %v309
        %v311 = vsel %vm299, %v289, %v292
        %v312 = vsel %vm302, %v298, 1326507024
        %v313 = vsel %vm301, %v295, %v312
        %v314 = vsel %vm300, %v311, %v313
        %v315 = vshll.u32 %v275, 8
        %v316 = vmul.u32.u64.compose %v315, %v314
        %v317 = vextract.low.u32 %v316
        %v318 = vextract.high.u32 %v316
        %v319 = vmul.u32.u64.compose %v315, %v310
        %v320 = vextract.low.u32 %v319
        %v321 = vextract.high.u32 %v319
        %v322 = vmul.u32 %v315, %v306
        %v323 = vadd.s32 %v318, %v320
        %vm324 = vc.u32 %v318, %v320
        %v325 = vadd.s32 %v321, 1
        %v326 = vsel %vm324, %v325, %v321
        %v327 = vadd.s32 %v322, %v326
        %v328 = vadd.s32 %v327, 536870912
        %v329 = vshrl.u32 %v328, 30
        %v330 = vshll.u32 %v329, 30
        %v331 = vsub.s32 %v327, %v330
        %vm332 = vcmp.lt.s32.totalorder %v331, 0
        %v333 = vsub.s32 0, %v331
        %v334 = vsel %vm332, %v333, %v331
        %v335 = vclz %v334
        %v336 = vsub.s32 %v335, 2
        %vm337 = vcmp.gt.s32.totalorder 0, %v336
        %v338 = vsel %vm337, 0, %v336
        %v339 = vsub.s32 32, %v338
        %v340 = vshll.u32 %v331, %v338
        %v341 = vshrl.u32 %v323, %v339
        %v342 = vor.u32 %v340, %v341
        %v343 = vsub.s32 4294967266, %v338
        %v344 = vadd.s32 %v343, 127
        %v345 = vshll.u32 %v344, 23
        %v346 = vor.u32 4788187, %v345
        %v347 = vand.u32 2147483647, %v346
        %v349 = vcvt.s32.f32 %v342
        %v350 = vmul.f32 %v349, %v347
        %v351 = vxor.u32 %v350, 2147483648
        %v352 = vsel %vm269, %v351, %v350
        %v353 = vsub.s32 4, %v329
        %v354 = vsel %vm269, %v353, %v329
        %v355 = vsel %vm268, %v162, %v352
        %v356 = vsel %vm268, 0, %v354
        %v357 = vcosq.f32.pop %v355
        %v358 = vsinq.f32.pop %v355
        %vm359 = vweird.f32 %v162
        %v360 = vadd.s32 %v356, 3
        %v361 = vand.u32 %v360, 3
        %vm362 = vcmp.lt.s32.totalorder %v361, 2
        %vm363 = vcmp.eq.s32.totalorder %v361, 0
        %v364 = vxor.u32 %v358, 2147483648
        %v365 = vsel %vm363, %v357, %v364
        %vm366 = vcmp.eq.s32.totalorder %v361, 2
        %v367 = vxor.u32 %v357, 2147483648
        %v368 = vsel %vm366, %v367, %v358
        %v369 = vsel %vm362, %v365, %v368
        %v370 = vsel %vm359, nan, %v369
        %371 = vst [vmem:[%s134] sm:$0xff] %v266
        %372 = vst [vmem:[%s134 + $0x8] sm:$0xff] %v370
        %s373 = sand.u32 %s67, 1
        %s374 = scalar_lea.sflag [#allocation4], %s373
        %s375 = sand.u32 %s67, 1
        %s376 = smul.addr %s375, 16
        %s377 = scalar_lea.vmem [#allocation5], %s376
        // Predicated region
        $region33: #{tpu_custom_call.1} parent=27 // pred_check
          %p378 = pneg %p77
        $region34: #{tpu_custom_call.1} parent=27 // pred_check_branch
          %380 = sbr.rel (%p378) target = $region36
        $region35: #{tpu_custom_call.1} parent=27 // pred_region
          %s381 = smul.u32 2, %s17
          %s383 = ssub.s32 256, 256
          %384 = vsyncadd %s374, %s383
          %s385 = smul.addr %s381, 128
          %s386 = scalar_lea.hbm %s2, %s385
          %s387 = sshll.u32 %s377, 4
          %s388 = int_to_ptr.vmem [resolvable:$true] %s387
          %393 = dma.vmem_to_hbm [thread:$0]  %s388, 256, %s386, %s374, 128, 128, 8
        $region36: #{tpu_custom_call.1} parent=27 // pred_fallthru
          _
      $region28: #{tpu_custom_call.1} parent=5 // pred_fallthru
        _
      %p394 = scmp.le.s32.totalorder 2, %s12
      // Predicated region
      $region37: #{tpu_custom_call.1} parent=5 // pred_check
        %p395 = pneg %p394
      $region38: #{tpu_custom_call.1} parent=5 // pred_check_branch
        %397 = sbr.rel (%p395) target = $region40
      $region39: #{tpu_custom_call.1} parent=5 // pred_region
        %s398 = ssub.s32 %s12, 2
        // Predicated region
        $region41: #{tpu_custom_call.1} parent=39 // pred_check
          %p399 = pneg %p83
        $region42: #{tpu_custom_call.1} parent=39 // pred_check_branch
          %401 = sbr.rel (%p399) target = $region44
        $region43: #{tpu_custom_call.1} parent=39 // pred_region
          %s402 = sand.u32 %s68, 1
          %s403 = scalar_lea.sflag [#allocation4], %s402
          %s404 = sand.u32 %s68, 1
          %s405 = smul.addr %s404, 16
          %s406 = scalar_lea.vmem [#allocation5], %s405
          %407 = dma.done %s403, 256
        $region44: #{tpu_custom_call.1} parent=39 // pred_fallthru
          _
      $region40: #{tpu_custom_call.1} parent=5 // pred_fallthru
        _
    $region6: #{tpu_custom_call.1} parent=1 // loop_footer
      %s16 = sadd.s32 1, %s12
    $region7: #{tpu_custom_call.1} parent=1 // loop_footer_branch
      %11 = sbr.rel target = $region3
    $region8: #{tpu_custom_call.1} parent=1 // loop_exit
      _
    %408 = vsyncpa [#allocation3], 1
    %s409 = scalar_lea.sflag [#allocation3], 1
    %410 = vsyncpa %s409, 1
    %411 = vsyncpa [#allocation4], 1
    %s412 = scalar_lea.sflag [#allocation4], 1
    %413 = vsyncpa %s412, 1

</llo_original>
